<compile_context>
chip_gen: v7x
topology: tpu7x:2x2x1
jax: 0.10.0
libtpu: 0.0.40
codegen_flags: <defaults>
</compile_context>

<pallas_src>
import jax
import jax.numpy as jnp
from jax import lax
from jax.experimental import pallas as pl
from jax.experimental.pallas import tpu as pltpu

N_PER_GRAPH = 8       # `n` in the PyTorch module: nodes per graph == node feat dim
CHANNELS = 16
BSIZE = 2
N_NODES = BSIZE * N_PER_GRAPH
EPS = 1e-5            # BatchNorm1d eps

# ---- slab row offsets (all starts 8-aligned; columns padded to 128) ---------
# data slab: (40, 128)
D_X, D_ADJ, D_POOL = 0, 16, 32
# param slab: (128, 128)
P_W1, P_W2, P_W3 = 0, 16, 48           # stacked [w_rel.T ; w_root.T] per layer
P_L1W, P_L2W = 80, 96                  # lin1 (bn3-folded), lin2 (zero-padded)
P_VEC, P_L2B = 112, 120                # vec rows: b1,s1,t1,b2,s2,t2,b3,l1b_f


def net_kernel(data_ref, par_ref, out_ref):
    n, C, N = N_PER_GRAPH, CHANNELS, N_NODES

    x = data_ref[D_X:D_X + N, 0:n]                    # (16, 8)  node features
    adj = data_ref[D_ADJ:D_ADJ + N, 0:N]              # (16, 16) A[dst, src] = 1
    pool = data_ref[D_POOL:D_POOL + 8, 0:N]           # (8, 16)  rows >= BSIZE are 0

    w1 = par_ref[P_W1:P_W1 + 2 * n, 0:C]              # (16, 16)
    w2 = par_ref[P_W2:P_W2 + 2 * C, 0:C]              # (32, 16)
    w3 = par_ref[P_W3:P_W3 + 2 * C, 0:C]              # (32, 16)
    l1w = par_ref[P_L1W:P_L1W + C, 0:C]               # (16, 16) bn3 scale folded in
    l2w = par_ref[P_L2W:P_L2W + C, :]                 # (16, 128) zero-padded
    vec = par_ref[P_VEC:P_VEC + 8, 0:C]               # (8, 16) packed bias/affine rows
    l2b = par_ref[P_L2B:P_L2B + 1, :]                 # (1, 128) zero-padded

    b1, s1, t1 = vec[0:1, :], vec[1:2, :], vec[2:3, :]
    b2, s2, t2 = vec[3:4, :], vec[4:5, :], vec[5:6, :]
    b3, l1b = vec[6:7, :], vec[7:8, :]

    def gconv(h, w_stacked, bias):
        # PyG GraphConv 'add': lin_rel(sum_j x_j) + lin_root(x_i), fused:
        #   [A@h | h] @ [w_rel.T ; w_root.T] + bias   -> 2 dots, 0 transposes.
        agg = jnp.dot(adj, h, preferred_element_type=jnp.float32)
        hh = jnp.concatenate([agg, h], axis=-1)
        return jnp.dot(hh, w_stacked, preferred_element_type=jnp.float32) + bias

    # TODO(synk): F.dropout(p=0.5) is a no-op in eval mode; not implemented.
    h = jnp.maximum(gconv(x, w1, b1), 0.0) * s1 + t1      # relu -> bn1 (eval affine)
    h = jnp.maximum(gconv(h, w2, b2), 0.0) * s2 + t2      # relu -> bn2
    h = jnp.maximum(gconv(h, w3, b3), 0.0)                # relu; bn3 folded into lin1

    # x.view(bsize, n, C).mean(dim=1) == pool @ h  (pool rows hold 1/n per graph)
    pooled = jnp.dot(pool, h, preferred_element_type=jnp.float32)          # (8, 16)
    z = jnp.maximum(
        jnp.dot(pooled, l1w, preferred_element_type=jnp.float32) + l1b, 0.0)
    out_ref[...] = jnp.dot(z, l2w, preferred_element_type=jnp.float32) + l2b


# ------------------------------ wrapper side ---------------------------------
def _put(slab, arr, r, c=0):
    return lax.dynamic_update_slice(slab, arr.astype(jnp.float32), (r, c))


def pack_data(x, adj, pool):
    slab = jnp.zeros((40, 128), jnp.float32)
    slab = _put(slab, x, D_X)
    slab = _put(slab, adj, D_ADJ)
    slab = _put(slab, pool, D_POOL)
    return slab


def pack_params(params):
    """Pre-transpose, stack rel/root, fold bn3 through the pool into lin1."""
    w1r, w1s, b1, s1, t1 = params[0:5]
    w2r, w2s, b2, s2, t2 = params[5:10]
    w3r, w3s, b3, s3, t3 = params[10:15]
    l1w, l1b, l2w, l2b = params[15:19]

    slab = jnp.zeros((128, 128), jnp.float32)
    slab = _put(slab, jnp.concatenate([w1r.T, w1s.T], axis=0), P_W1)   # (2n, C)
    slab = _put(slab, jnp.concatenate([w2r.T, w2s.T], axis=0), P_W2)   # (2C, C)
    slab = _put(slab, jnp.concatenate([w3r.T, w3s.T], axis=0), P_W3)   # (2C, C)
    # bn3 eval affine folded through mean-pool (pool rows sum to 1) into lin1:
    #   pooled' = pooled*s3 + t3  =>  l1w.T <- diag(s3)@l1w.T, l1b <- l1b + t3@l1w.T
    slab = _put(slab, l1w.T * s3.reshape(-1, 1), P_L1W)
    slab = _put(slab, l2w.T, P_L2W)                                    # (C, 1) in col 0
    vec_rows = [b1, s1, t1, b2, s2, t2, b3, l1b + t3 @ l1w.T]
    for i, v in enumerate(vec_rows):
        slab = _put(slab, v, P_VEC + i)
    slab = _put(slab, l2b, P_L2B)
    return slab


def net_forward(data_slab, param_slab):
    """Everything resident in VMEM; single gridless invocation, 2 input DMAs."""
    out = pl.pallas_call(
        net_kernel,
        out_shape=jax.ShapeDtypeStruct((8, 128), jnp.float32),
        in_specs=[pl.BlockSpec(memory_space=pltpu.MemorySpace.VMEM)] * 2,
        out_specs=pl.BlockSpec(memory_space=pltpu.MemorySpace.VMEM),
    )(data_slab, param_slab)
    # padded lane/sublane-dense output -> real (BSIZE,) result (torch .squeeze())
    return out[:BSIZE, 0]


# ------------------------- params / data construction ------------------------
def make_params(key):
    """Deterministic parameter init mirroring the module's __init__ shapes."""
    n, c = N_PER_GRAPH, CHANNELS
    ks = jax.random.split(key, 16)

    def rnd(k, shape, scale=0.1):
        return (scale * jax.random.normal(k, shape)).astype(jnp.float32)

    params = []
    in_dims = [n, c, c]
    for layer in range(3):
        din = in_dims[layer]
        w_rel = rnd(ks[4 * layer + 0], (c, din))         # lin_rel weight (out, in)
        w_root = rnd(ks[4 * layer + 1], (c, din))        # lin_root weight (out, in)
        bias = rnd(ks[4 * layer + 2], (1, c))            # lin_rel bias
        # BatchNorm1d eval-mode affine: gamma / sqrt(var+eps), beta - mean*scale
        gamma = 1.0 + rnd(ks[4 * layer + 3], (1, c), 0.05)
        beta = jnp.zeros((1, c), jnp.float32)
        run_mean = jnp.zeros((1, c), jnp.float32)
        run_var = jnp.ones((1, c), jnp.float32)
        scale = gamma / jnp.sqrt(run_var + EPS)
        shift = beta - run_mean * scale
        params += [w_rel, w_root, bias, scale, shift]

    l1w = rnd(ks[12], (c, c))
    l1b = rnd(ks[13], (1, c))
    l2w = rnd(ks[14], (1, c))
    l2b = rnd(ks[15], (1, 1))
    params += [l1w, l1b, l2w, l2b]
    return params


def make_graph():
    """Ring graph per example, batched block-diagonally; dense adjacency."""
    n, b = N_PER_GRAPH, BSIZE
    N = b * n
    adj = jnp.zeros((N, N), jnp.float32)
    for g in range(b):
        off = g * n
        for i in range(n):
            j = (i + 1) % n
            adj = adj.at[off + j, off + i].set(1.0)   # edge i -> j (dst=j, src=i)
            adj = adj.at[off + i, off + j].set(1.0)   # edge j -> i
    pool = jnp.zeros((b, N), jnp.float32)
    for g in range(b):
        pool = pool.at[g, g * n:(g + 1) * n].set(1.0 / n)
    return adj, pool


def reference_forward(x, adj, pool, params):
    """Plain-JAX reference (unfused, unfolded) for correctness check."""
    h = x
    for layer in range(3):
        w_rel, w_root, bias, scale, shift = params[5 * layer: 5 * layer + 5]
        y = (adj @ h) @ w_rel.T + bias + h @ w_root.T
        h = jnp.maximum(y, 0.0) * scale + shift          # relu -> bn (matches spec)
    l1w, l1b, l2w, l2b = params[15:]
    pooled = pool @ h
    z = jnp.maximum(pooled @ l1w.T + l1b, 0.0)
    return (z @ l2w.T + l2b).squeeze(-1)


if __name__ == "__main__":
    key = jax.random.PRNGKey(0)
    kx, kp = jax.random.split(key)

    # data.x: (bsize * n, n) node features (view(-1, n) in the torch forward)
    x = jax.random.normal(kx, (BSIZE * N_PER_GRAPH, N_PER_GRAPH),
                          dtype=jnp.float32)
    adj, pool = make_graph()
    params = make_params(kp)

    data_slab = pack_data(x, adj, pool)
    param_slab = pack_params(params)

    out = net_forward(data_slab, param_slab)
    out = jax.block_until_ready(out)

    ref = reference_forward(x, adj, pool, params)
    assert out.shape == (BSIZE,)
    assert jnp.allclose(out, ref, atol=1e-4, rtol=1e-4), (out, ref)

    print("KERNEL_OK")
</pallas_src>

<mosaic_0001>
module attributes {stable_mosaic.version = 11 : i64} {
  func.func @net_kernel(%arg0: memref<40x128xf32, #tpu.memory_space<vmem>>, %arg1: memref<128x128xf32, #tpu.memory_space<vmem>>, %arg2: memref<8x128xf32, #tpu.memory_space<vmem>>) attributes {dimension_semantics = [], scalar_prefetch = 0 : i64, scratch_operands = 0 : i64, tpu.core_type = #tpu.core_type<tc>} {
    %c0 = arith.constant 0 : index
    %c0_0 = arith.constant 0 : index
    %0 = vector.load %arg0[%c0, %c0_0] : memref<40x128xf32, #tpu.memory_space<vmem>>, vector<16x8xf32>
    %c16 = arith.constant 16 : index
    %c0_1 = arith.constant 0 : index
    %1 = vector.load %arg0[%c16, %c0_1] : memref<40x128xf32, #tpu.memory_space<vmem>>, vector<16x16xf32>
    %c32 = arith.constant 32 : index
    %c0_2 = arith.constant 0 : index
    %2 = vector.load %arg0[%c32, %c0_2] : memref<40x128xf32, #tpu.memory_space<vmem>>, vector<8x16xf32>
    %c0_3 = arith.constant 0 : index
    %c0_4 = arith.constant 0 : index
    %3 = vector.load %arg1[%c0_3, %c0_4] : memref<128x128xf32, #tpu.memory_space<vmem>>, vector<16x16xf32>
    %c16_5 = arith.constant 16 : index
    %c0_6 = arith.constant 0 : index
    %4 = vector.load %arg1[%c16_5, %c0_6] : memref<128x128xf32, #tpu.memory_space<vmem>>, vector<32x16xf32>
    %c48 = arith.constant 48 : index
    %c0_7 = arith.constant 0 : index
    %5 = vector.load %arg1[%c48, %c0_7] : memref<128x128xf32, #tpu.memory_space<vmem>>, vector<32x16xf32>
    %c80 = arith.constant 80 : index
    %c0_8 = arith.constant 0 : index
    %6 = vector.load %arg1[%c80, %c0_8] : memref<128x128xf32, #tpu.memory_space<vmem>>, vector<16x16xf32>
    %c96 = arith.constant 96 : index
    %c0_9 = arith.constant 0 : index
    %7 = vector.load %arg1[%c96, %c0_9] : memref<128x128xf32, #tpu.memory_space<vmem>>, vector<16x128xf32>
    %c112 = arith.constant 112 : index
    %c0_10 = arith.constant 0 : index
    %8 = vector.load %arg1[%c112, %c0_10] : memref<128x128xf32, #tpu.memory_space<vmem>>, vector<8x16xf32>
    %c120 = arith.constant 120 : index
    %c0_11 = arith.constant 0 : index
    %9 = vector.load %arg1[%c120, %c0_11] : memref<128x128xf32, #tpu.memory_space<vmem>>, vector<1x128xf32>
    %10 = vector.extract_strided_slice %8 {offsets = [0, 0], sizes = [1, 16], strides = [1, 1]} : vector<8x16xf32> to vector<1x16xf32>
    %11 = vector.extract_strided_slice %8 {offsets = [1, 0], sizes = [1, 16], strides = [1, 1]} : vector<8x16xf32> to vector<1x16xf32>
    %12 = vector.extract_strided_slice %8 {offsets = [2, 0], sizes = [1, 16], strides = [1, 1]} : vector<8x16xf32> to vector<1x16xf32>
    %13 = vector.extract_strided_slice %8 {offsets = [3, 0], sizes = [1, 16], strides = [1, 1]} : vector<8x16xf32> to vector<1x16xf32>
    %14 = vector.extract_strided_slice %8 {offsets = [4, 0], sizes = [1, 16], strides = [1, 1]} : vector<8x16xf32> to vector<1x16xf32>
    %15 = vector.extract_strided_slice %8 {offsets = [5, 0], sizes = [1, 16], strides = [1, 1]} : vector<8x16xf32> to vector<1x16xf32>
    %16 = vector.extract_strided_slice %8 {offsets = [6, 0], sizes = [1, 16], strides = [1, 1]} : vector<8x16xf32> to vector<1x16xf32>
    %17 = vector.extract_strided_slice %8 {offsets = [7, 0], sizes = [1, 16], strides = [1, 1]} : vector<8x16xf32> to vector<1x16xf32>
    %cst = arith.constant dense<0.000000e+00> : vector<16x8xf32>
    %18 = tpu.matmul %1, %0, %cst {dimension_numbers = #tpu.dot_dimension_numbers<[1], [0], [0], [1], [0, 0, 1, 1], [], []>} : vector<16x16xf32>, vector<16x8xf32>, vector<16x8xf32> -> vector<16x8xf32>
    %19 = tpu.concatenate %18, %0 in 1 : vector<16x8xf32>, vector<16x8xf32> -> vector<16x16xf32>
    %cst_12 = arith.constant dense<0.000000e+00> : vector<16x16xf32>
    %20 = tpu.matmul %19, %3, %cst_12 {dimension_numbers = #tpu.dot_dimension_numbers<[1], [0], [0], [1], [0, 0, 1, 1], [], []>} : vector<16x16xf32>, vector<16x16xf32>, vector<16x16xf32> -> vector<16x16xf32>
    %21 = vector.broadcast %10 : vector<1x16xf32> to vector<16x16xf32>
    %22 = arith.addf %20, %21 : vector<16x16xf32>
    %cst_13 = arith.constant 0.000000e+00 : f32
    %23 = vector.broadcast %cst_13 : f32 to vector<16x16xf32>
    %24 = arith.maximumf %22, %23 : vector<16x16xf32>
    %25 = vector.broadcast %11 : vector<1x16xf32> to vector<16x16xf32>
    %26 = arith.mulf %24, %25 : vector<16x16xf32>
    %27 = vector.broadcast %12 : vector<1x16xf32> to vector<16x16xf32>
    %28 = arith.addf %26, %27 : vector<16x16xf32>
    %cst_14 = arith.constant dense<0.000000e+00> : vector<16x16xf32>
    %29 = tpu.matmul %1, %28, %cst_14 {dimension_numbers = #tpu.dot_dimension_numbers<[1], [0], [0], [1], [0, 0, 1, 1], [], []>} : vector<16x16xf32>, vector<16x16xf32>, vector<16x16xf32> -> vector<16x16xf32>
    %30 = tpu.concatenate %29, %28 in 1 : vector<16x16xf32>, vector<16x16xf32> -> vector<16x32xf32>
    %cst_15 = arith.constant dense<0.000000e+00> : vector<16x16xf32>
    %31 = tpu.matmul %30, %4, %cst_15 {dimension_numbers = #tpu.dot_dimension_numbers<[1], [0], [0], [1], [0, 0, 1, 1], [], []>} : vector<16x32xf32>, vector<32x16xf32>, vector<16x16xf32> -> vector<16x16xf32>
    %32 = vector.broadcast %13 : vector<1x16xf32> to vector<16x16xf32>
    %33 = arith.addf %31, %32 : vector<16x16xf32>
    %cst_16 = arith.constant 0.000000e+00 : f32
    %34 = vector.broadcast %cst_16 : f32 to vector<16x16xf32>
    %35 = arith.maximumf %33, %34 : vector<16x16xf32>
    %36 = vector.broadcast %14 : vector<1x16xf32> to vector<16x16xf32>
    %37 = arith.mulf %35, %36 : vector<16x16xf32>
    %38 = vector.broadcast %15 : vector<1x16xf32> to vector<16x16xf32>
    %39 = arith.addf %37, %38 : vector<16x16xf32>
    %cst_17 = arith.constant dense<0.000000e+00> : vector<16x16xf32>
    %40 = tpu.matmul %1, %39, %cst_17 {dimension_numbers = #tpu.dot_dimension_numbers<[1], [0], [0], [1], [0, 0, 1, 1], [], []>} : vector<16x16xf32>, vector<16x16xf32>, vector<16x16xf32> -> vector<16x16xf32>
    %41 = tpu.concatenate %40, %39 in 1 : vector<16x16xf32>, vector<16x16xf32> -> vector<16x32xf32>
    %cst_18 = arith.constant dense<0.000000e+00> : vector<16x16xf32>
    %42 = tpu.matmul %41, %5, %cst_18 {dimension_numbers = #tpu.dot_dimension_numbers<[1], [0], [0], [1], [0, 0, 1, 1], [], []>} : vector<16x32xf32>, vector<32x16xf32>, vector<16x16xf32> -> vector<16x16xf32>
    %43 = vector.broadcast %16 : vector<1x16xf32> to vector<16x16xf32>
    %44 = arith.addf %42, %43 : vector<16x16xf32>
    %cst_19 = arith.constant 0.000000e+00 : f32
    %45 = vector.broadcast %cst_19 : f32 to vector<16x16xf32>
    %46 = arith.maximumf %44, %45 : vector<16x16xf32>
    %cst_20 = arith.constant dense<0.000000e+00> : vector<8x16xf32>
    %47 = tpu.matmul %2, %46, %cst_20 {dimension_numbers = #tpu.dot_dimension_numbers<[1], [0], [0], [1], [0, 0, 1, 1], [], []>} : vector<8x16xf32>, vector<16x16xf32>, vector<8x16xf32> -> vector<8x16xf32>
    %cst_21 = arith.constant dense<0.000000e+00> : vector<8x16xf32>
    %48 = tpu.matmul %47, %6, %cst_21 {dimension_numbers = #tpu.dot_dimension_numbers<[1], [0], [0], [1], [0, 0, 1, 1], [], []>} : vector<8x16xf32>, vector<16x16xf32>, vector<8x16xf32> -> vector<8x16xf32>
    %49 = vector.broadcast %17 : vector<1x16xf32> to vector<8x16xf32>
    %50 = arith.addf %48, %49 : vector<8x16xf32>
    %cst_22 = arith.constant 0.000000e+00 : f32
    %51 = vector.broadcast %cst_22 : f32 to vector<8x16xf32>
    %52 = arith.maximumf %50, %51 : vector<8x16xf32>
    %cst_23 = arith.constant dense<0.000000e+00> : vector<8x128xf32>
    %53 = tpu.matmul %52, %7, %cst_23 {dimension_numbers = #tpu.dot_dimension_numbers<[1], [0], [0], [1], [0, 0, 1, 1], [], []>} : vector<8x16xf32>, vector<16x128xf32>, vector<8x128xf32> -> vector<8x128xf32>
    %54 = vector.broadcast %9 : vector<1x128xf32> to vector<8x128xf32>
    %55 = arith.addf %53, %54 : vector<8x128xf32>
    %c0_24 = arith.constant 0 : index
    %c0_25 = arith.constant 0 : index
    %56 = vector.load %arg2[%c0_24, %c0_25] : memref<8x128xf32, #tpu.memory_space<vmem>>, vector<8x128xf32>
    tpu.vector_store %arg2[%c0_24, %c0_25], %55 {strides = array<i32>} : memref<8x128xf32, #tpu.memory_space<vmem>>, vector<8x128xf32>,
    return
  }
}

</mosaic_0001>

<llo_original>
// kernel: tpu_custom_call.1
$region0: #{tpu_custom_call.1}
  #allocation0 [shape = 'u32[]', space=smem, size = 0x4, offset = 0x4, fixed_abs, tag = 'smem constant byte address 0x4 - core index']
  #allocation1 [shape = 'u32[144,128]{1,0:T(1,128)}', space=vmem, size = 0x12000, scoped, tag = 'internal scratch']
  %s0 = inlined_call_operand.hbm [shape: f32[40,128], index: 0, kind: input, shape index: {}]
  %s1 = inlined_call_operand.hbm [shape: f32[128,128], index: 1, kind: input, shape index: {}]
  %s2 = inlined_call_operand.hbm [shape: f32[8,128], index: 2, kind: output, shape index: {}]
  %s3 = sld [smem:[#allocation0]]
  $region26: #{tpu_custom_call.1} parent=0
    _
  %s5 = ssub.s32 1, %s3
  %s6 = scalar_select 0, %s5, %s3
  $region1: #{tpu_custom_call.1} parent=0
    #allocation2 [shape = 'u8[20480]{0}', space=vmem, size = 0x5000, scoped, tag = 'input window, operand 0, single buffered']
    #allocation3 [shape = 's32[1]{0}', space=sflag, size = 0x4, scoped, tag = 'scoped memory for tpu_custom_call.1']
    #allocation4 [shape = 's32[1]{0}', space=sflag, size = 0x4, scoped, tag = 'scoped memory for tpu_custom_call.1']
    #allocation5 [shape = 'u8[65536]{0}', space=vmem, size = 0x10000, scoped, tag = 'input window, operand 1, single buffered']
    #allocation6 [shape = 's32[1]{0}', space=sflag, size = 0x4, scoped, tag = 'scoped memory for tpu_custom_call.1']
    #allocation7 [shape = 'u8[4096]{0}', space=vmem, size = 0x1000, scoped, tag = 'output window, operand 0, single buffered']
    %7 = vsyncpa [#allocation3], 0
    %8 = vsyncpa [#allocation6], 0
    %9 = vsyncpa [#allocation4], 0
    // Predicated region
    $region2: #{tpu_custom_call.1} parent=1 // pred_check
      _
    $region3: #{tpu_custom_call.1} parent=1 // pred_check_branch
      %11 = sbr.rel (0) target = $region5
    $region4: #{tpu_custom_call.1} parent=1 // pred_region
      %s13 = ssub.s32 640, 640
      %14 = vsyncadd [#allocation3], %s13
      %s15 = sshll.u32 [#allocation2], 4
      %s16 = int_to_ptr.vmem [resolvable:$true] %s15
      %21 = dma.hbm_to_vmem [thread:$0]  %s0, 640, %s16, [#allocation3], 128, 128, 8
    $region5: #{tpu_custom_call.1} parent=1 // pred_fallthru
      _
    // Predicated region
    $region6: #{tpu_custom_call.1} parent=1 // pred_check
      _
    $region7: #{tpu_custom_call.1} parent=1 // pred_check_branch
      %23 = sbr.rel (0) target = $region9
    $region8: #{tpu_custom_call.1} parent=1 // pred_region
      %s25 = ssub.s32 2048, 2048
      %26 = vsyncadd [#allocation6], %s25
      %s27 = sshll.u32 [#allocation5], 4
      %s28 = int_to_ptr.vmem [resolvable:$true] %s27
      %33 = dma.hbm_to_vmem [thread:$0]  %s1, 2048, %s28, [#allocation6], 128, 128, 8
    $region9: #{tpu_custom_call.1} parent=1 // pred_fallthru
      _
    // Predicated region
    $region10: #{tpu_custom_call.1} parent=1 // pred_check
      _
    $region11: #{tpu_custom_call.1} parent=1 // pred_check_branch
      %35 = sbr.rel (0) target = $region13
    $region12: #{tpu_custom_call.1} parent=1 // pred_region
      %36 = dma.done [#allocation3], 640
    $region13: #{tpu_custom_call.1} parent=1 // pred_fallthru
      _
    // Predicated region
    $region14: #{tpu_custom_call.1} parent=1 // pred_check
      _
    $region15: #{tpu_custom_call.1} parent=1 // pred_check_branch
      %38 = sbr.rel (0) target = $region17
    $region16: #{tpu_custom_call.1} parent=1 // pred_region
      %39 = dma.done [#allocation6], 2048
    $region17: #{tpu_custom_call.1} parent=1 // pred_fallthru
      _
    %v40 = vld [vmem:[#allocation2] sm:$0xff]
    %v41 = vld [vmem:[#allocation2 + $0x8] sm:$0xff]
    %v42 = vld [vmem:[#allocation2 + $0x10] sm:$0xff]
    %v43 = vld [vmem:[#allocation2 + $0x18] sm:$0xff]
    %v44 = vld [vmem:[#allocation2 + $0x20] sm:$0xff]
    %v45 = vld [vmem:[#allocation5] sm:$0xff]
    %v46 = vld [vmem:[#allocation5 + $0x8] sm:$0xff]
    %v47 = vld [vmem:[#allocation5 + $0x10] sm:$0xff]
    %v48 = vld [vmem:[#allocation5 + $0x18] sm:$0xff]
    %v49 = vld [vmem:[#allocation5 + $0x20] sm:$0xff]
    %v50 = vld [vmem:[#allocation5 + $0x28] sm:$0xff]
    %v51 = vld [vmem:[#allocation5 + $0x30] sm:$0xff]
    %v52 = vld [vmem:[#allocation5 + $0x38] sm:$0xff]
    %v53 = vld [vmem:[#allocation5 + $0x40] sm:$0xff]
    %v54 = vld [vmem:[#allocation5 + $0x48] sm:$0xff]
    %v55 = vld [vmem:[#allocation5 + $0x50] sm:$0xff]
    %v56 = vld [vmem:[#allocation5 + $0x58] sm:$0xff]
    %v57 = vld [vmem:[#allocation5 + $0x60] sm:$0xff]
    %v58 = vld [vmem:[#allocation5 + $0x68] sm:$0xff]
    %v59 = vld [vmem:[#allocation5 + $0x70] sm:$0xff]
    %v60 = vld [vmem:[#allocation5 + $0x78] sm:$0x1]
    %vm61 = vcmask 130048
    %v63 = vsel %vm61, %v42, 0
    %v66 = vsel %vm61, %v43, 0
    %68 = vmatprep.subr.mxu0 0.0
    %69 = vmatpush1.msra.mxu0 %v40
    %70 = vmatprep.subr.mxu0 0.0
    %71 = vmatpush1.msra.mxu0 %v41
    %72 = vmatprep.subr.mxu0 0.0
    %73 = vmatpush1.msra.mxu0 0.0
    %74 = vmatprep.subr.mxu0 0.0
    %75 = vmatpush1.msra.mxu0 0.0
    %76 = vmatprep.subr.mxu0 0.0
    %77 = vmatpush1.msra.mxu0 0.0
    %78 = vmatprep.subr.mxu0 0.0
    %79 = vmatpush1.msra.mxu0 0.0
    %80 = vmatprep.subr.mxu0 0.0
    %81 = vmatpush1.msra.mxu0 0.0
    %82 = vmatprep.subr.mxu0 0.0
    %83 = vmatpush1.msra.mxu0 0.0
    %84 = vmatprep.subr.mxu0 0.0
    %85 = vmatpush1.msra.mxu0 0.0
    %86 = vmatprep.subr.mxu0 0.0
    %87 = vmatpush1.msra.mxu0 0.0
    %88 = vmatprep.subr.mxu0 0.0
    %89 = vmatpush1.msra.mxu0 0.0
    %90 = vmatprep.subr.mxu0 0.0
    %91 = vmatpush1.msra.mxu0 0.0
    %92 = vmatprep.subr.mxu0 0.0
    %93 = vmatpush1.msra.mxu0 0.0
    %94 = vmatprep.subr.mxu0 0.0
    %95 = vmatpush1.msra.mxu0 0.0
    %96 = vmatprep.subr.mxu0 0.0
    %97 = vmatpush1.msra.mxu0 0.0
    %98 = vmatprep.subr.mxu0 0.0
    %99 = vmatpush1.msra.mxu0 0.0
    %100 = vmatprep.subr.mxu0 0.0
    %101 = vmatpush1.msra.mxu0 0.0
    %102 = vmatprep.subr.mxu0 0.0
    %103 = vmatpush1.msra.mxu0 0.0
    %104 = vmatprep.subr.mxu0 0.0
    %105 = vmatpush1.msra.mxu0 0.0
    %106 = vmatprep.subr.mxu0 0.0
    %107 = vmatpush1.msra.mxu0 0.0
    %108 = vmatprep.subr.mxu0 0.0
    %109 = vmatpush1.msra.mxu0 0.0
    %110 = vmatprep.subr.mxu0 0.0
    %111 = vmatpush1.msra.mxu0 0.0
    %112 = vmatprep.subr.mxu0 0.0
    %113 = vmatpush1.msra.mxu0 0.0
    %114 = vmatprep.subr.mxu0 0.0
    %115 = vmatpush1.msra.mxu0 0.0
    %116 = vmatprep.subr.mxu0 0.0
    %117 = vmatpush1.msra.mxu0 0.0
    %118 = vmatprep.subr.mxu0 0.0
    %119 = vmatpush1.msra.mxu0 0.0
    %120 = vmatprep.subr.mxu0 0.0
    %121 = vmatpush1.msra.mxu0 0.0
    %122 = vmatprep.subr.mxu0 0.0
    %123 = vmatpush1.msra.mxu0 0.0
    %124 = vmatprep.subr.mxu0 0.0
    %125 = vmatpush1.msra.mxu0 0.0
    %126 = vmatprep.subr.mxu0 0.0
    %127 = vmatpush1.msra.mxu0 0.0
    %128 = vmatprep.subr.mxu0 0.0
    %129 = vmatpush1.msra.mxu0 0.0
    %130 = vmatprep.subr.mxu0 0.0
    %131 = vmatpush1.msra.mxu0 0.0
    %132 = vmatprep.mubr.f32.mxu0 0.0
    %133 = vmatmul.mubr.f32.gmra.mrb[0].mxu0 %v63
    %v134 = vpop.f32.mrb[0].mxu0
    %v135 = vadd.f32 0.0, %v134
    %v136 = vpop.f32.mrb[0].mxu0
    %137 = vmatprep.mubr.f32.mxu0 0.0
    %138 = vmatmul.mubr.f32.gmra.mrb[0].mxu0 %v66
    %v139 = vpop.f32.mrb[0].mxu0
    %v140 = vadd.f32 0.0, %v139
    %v141 = vpop.f32.mrb[0].mxu0
    %142 = vdwg.mxu0
    %145 = vrot.lane.b32.xlu0 %v40, 8
    %v146 = vpop.permute.xlu0 %145
    %147 = vrot.lane.b32.xlu0 %v41, 8
    %v148 = vpop.permute.xlu0 %147
    %vm151 = vcmask 64512
    %v152 = vsel %vm151, %v135, %v146
    %v153 = vsel %vm151, %v140, %v148
    %v154 = vlaneseq
    %v155 = vshrl.u32 %v154, 7
    %v156 = vsub.s32 0, %v155
    %v157 = vrot.slane %v59, %v156
    %v159 = vsel %vm61, %v152, 0
    %v162 = vsel %vm61, %v153, 0
    %164 = vmatprep.subr.mxu0 0.0
    %165 = vmatpush1.msra.mxu0 %v45
    %166 = vmatprep.subr.mxu0 0.0
    %167 = vmatpush1.msra.mxu0 %v46
    %168 = vmatprep.subr.mxu0 0.0
    %169 = vmatpush1.msra.mxu0 0.0
    %170 = vmatprep.subr.mxu0 0.0
    %171 = vmatpush1.msra.mxu0 0.0
    %172 = vmatprep.subr.mxu0 0.0
    %173 = vmatpush1.msra.mxu0 0.0
    %174 = vmatprep.subr.mxu0 0.0
    %175 = vmatpush1.msra.mxu0 0.0
    %176 = vmatprep.subr.mxu0 0.0
    %177 = vmatpush1.msra.mxu0 0.0
    %178 = vmatprep.subr.mxu0 0.0
    %179 = vmatpush1.msra.mxu0 0.0
    %180 = vmatprep.subr.mxu0 0.0
    %181 = vmatpush1.msra.mxu0 0.0
    %182 = vmatprep.subr.mxu0 0.0
    %183 = vmatpush1.msra.mxu0 0.0
    %184 = vmatprep.subr.mxu0 0.0
    %185 = vmatpush1.msra.mxu0 0.0
    %186 = vmatprep.subr.mxu0 0.0
    %187 = vmatpush1.msra.mxu0 0.0
    %188 = vmatprep.subr.mxu0 0.0
    %189 = vmatpush1.msra.mxu0 0.0
    %190 = vmatprep.subr.mxu0 0.0
    %191 = vmatpush1.msra.mxu0 0.0
    %192 = vmatprep.subr.mxu0 0.0
    %193 = vmatpush1.msra.mxu0 0.0
    %194 = vmatprep.subr.mxu0 0.0
    %195 = vmatpush1.msra.mxu0 0.0
    %196 = vmatprep.subr.mxu0 0.0
    %197 = vmatpush1.msra.mxu0 0.0
    %198 = vmatprep.subr.mxu0 0.0
    %199 = vmatpush1.msra.mxu0 0.0
    %200 = vmatprep.subr.mxu0 0.0
    %201 = vmatpush1.msra.mxu0 0.0
    %202 = vmatprep.subr.mxu0 0.0
    %203 = vmatpush1.msra.mxu0 0.0
    %204 = vmatprep.subr.mxu0 0.0
    %205 = vmatpush1.msra.mxu0 0.0
    %206 = vmatprep.subr.mxu0 0.0
    %207 = vmatpush1.msra.mxu0 0.0
    %208 = vmatprep.subr.mxu0 0.0
    %209 = vmatpush1.msra.mxu0 0.0
    %210 = vmatprep.subr.mxu0 0.0
    %211 = vmatpush1.msra.mxu0 0.0
    %212 = vmatprep.subr.mxu0 0.0
    %213 = vmatpush1.msra.mxu0 0.0
    %214 = vmatprep.subr.mxu0 0.0
    %215 = vmatpush1.msra.mxu0 0.0
    %216 = vmatprep.subr.mxu0 0.0
    %217 = vmatpush1.msra.mxu0 0.0
    %218 = vmatprep.subr.mxu0 0.0
    %219 = vmatpush1.msra.mxu0 0.0
    %220 = vmatprep.subr.mxu0 0.0
    %221 = vmatpush1.msra.mxu0 0.0
    %222 = vmatprep.subr.mxu0 0.0
    %223 = vmatpush1.msra.mxu0 0.0
    %224 = vmatprep.subr.mxu0 0.0
    %225 = vmatpush1.msra.mxu0 0.0
    %226 = vmatprep.subr.mxu0 0.0
    %227 = vmatpush1.msra.mxu0 0.0
    %228 = vmatprep.mubr.f32.mxu0 0.0
    %229 = vmatmul.mubr.f32.gmra.mrb[0].mxu0 %v159
    %v230 = vpop.f32.mrb[0].mxu0
    %v231 = vadd.f32 %v157, %v230
    %v232 = vpop.f32.mrb[0].mxu0
    %233 = vmatprep.mubr.f32.mxu0 0.0
    %234 = vmatmul.mubr.f32.gmra.mrb[0].mxu0 %v162
    %v235 = vpop.f32.mrb[0].mxu0
    %v236 = vadd.f32 %v157, %v235
    %v237 = vpop.f32.mrb[0].mxu0
    %238 = vdwg.mxu0
    %v239 = vmax.f32 %v231, 0.0
    %v240 = vmax.f32 %v236, 0.0
    %v241 = vlaneseq
    %v242 = vshrl.u32 %v241, 7
    %v243 = vsub.s32 1, %v242
    %v244 = vrot.slane %v59, %v243
    %v245 = vmul.f32 %v239, %v244
    %v246 = vmul.f32 %v240, %v244
    %v247 = vlaneseq
    %v248 = vshrl.u32 %v247, 7
    %v249 = vsub.s32 2, %v248
    %v250 = vrot.slane %v59, %v249
    %v251 = vadd.f32 %v245, %v250
    %v252 = vadd.f32 %v246, %v250
    %253 = vmatprep.subr.mxu0 0.0
    %254 = vmatpush1.msra.mxu0 %v251
    %255 = vmatprep.subr.mxu0 0.0
    %256 = vmatpush1.msra.mxu0 %v252
    %257 = vmatprep.subr.mxu0 0.0
    %258 = vmatpush1.msra.mxu0 0.0
    %259 = vmatprep.subr.mxu0 0.0
    %260 = vmatpush1.msra.mxu0 0.0
    %261 = vmatprep.subr.mxu0 0.0
    %262 = vmatpush1.msra.mxu0 0.0
    %263 = vmatprep.subr.mxu0 0.0
    %264 = vmatpush1.msra.mxu0 0.0
    %265 = vmatprep.subr.mxu0 0.0
    %266 = vmatpush1.msra.mxu0 0.0
    %267 = vmatprep.subr.mxu0 0.0
    %268 = vmatpush1.msra.mxu0 0.0
    %269 = vmatprep.subr.mxu0 0.0
    %270 = vmatpush1.msra.mxu0 0.0
    %271 = vmatprep.subr.mxu0 0.0
    %272 = vmatpush1.msra.mxu0 0.0
    %273 = vmatprep.subr.mxu0 0.0
    %274 = vmatpush1.msra.mxu0 0.0
    %275 = vmatprep.subr.mxu0 0.0
    %276 = vmatpush1.msra.mxu0 0.0
    %277 = vmatprep.subr.mxu0 0.0
    %278 = vmatpush1.msra.mxu0 0.0
    %279 = vmatprep.subr.mxu0 0.0
    %280 = vmatpush1.msra.mxu0 0.0
    %281 = vmatprep.subr.mxu0 0.0
    %282 = vmatpush1.msra.mxu0 0.0
    %283 = vmatprep.subr.mxu0 0.0
    %284 = vmatpush1.msra.mxu0 0.0
    %285 = vmatprep.subr.mxu0 0.0
    %286 = vmatpush1.msra.mxu0 0.0
    %287 = vmatprep.subr.mxu0 0.0
    %288 = vmatpush1.msra.mxu0 0.0
    %289 = vmatprep.subr.mxu0 0.0
    %290 = vmatpush1.msra.mxu0 0.0
    %291 = vmatprep.subr.mxu0 0.0
    %292 = vmatpush1.msra.mxu0 0.0
    %293 = vmatprep.subr.mxu0 0.0
    %294 = vmatpush1.msra.mxu0 0.0
    %295 = vmatprep.subr.mxu0 0.0
    %296 = vmatpush1.msra.mxu0 0.0
    %297 = vmatprep.subr.mxu0 0.0
    %298 = vmatpush1.msra.mxu0 0.0
    %299 = vmatprep.subr.mxu0 0.0
    %300 = vmatpush1.msra.mxu0 0.0
    %301 = vmatprep.subr.mxu0 0.0
    %302 = vmatpush1.msra.mxu0 0.0
    %303 = vmatprep.subr.mxu0 0.0
    %304 = vmatpush1.msra.mxu0 0.0
    %305 = vmatprep.subr.mxu0 0.0
    %306 = vmatpush1.msra.mxu0 0.0
    %307 = vmatprep.subr.mxu0 0.0
    %308 = vmatpush1.msra.mxu0 0.0
    %309 = vmatprep.subr.mxu0 0.0
    %310 = vmatpush1.msra.mxu0 0.0
    %311 = vmatprep.subr.mxu0 0.0
    %312 = vmatpush1.msra.mxu0 0.0
    %313 = vmatprep.subr.mxu0 0.0
    %314 = vmatpush1.msra.mxu0 0.0
    %315 = vmatprep.subr.mxu0 0.0
    %316 = vmatpush1.msra.mxu0 0.0
    %317 = vmatprep.mubr.f32.mxu0 0.0
    %318 = vmatmul.mubr.f32.gmra.mrb[0].mxu0 %v63
    %v319 = vpop.f32.mrb[0].mxu0
    %v320 = vadd.f32 0.0, %v319
    %v321 = vpop.f32.mrb[0].mxu0
    %322 = vmatprep.mubr.f32.mxu0 0.0
    %323 = vmatmul.mubr.f32.gmra.mrb[0].mxu0 %v66
    %v324 = vpop.f32.mrb[0].mxu0
    %v325 = vadd.f32 0.0, %v324
    %v326 = vpop.f32.mrb[0].mxu0
    %327 = vdwg.mxu0
    %330 = vrot.lane.b32.xlu0 %v251, 16
    %v331 = vpop.permute.xlu0 %330
    %332 = vrot.lane.b32.xlu0 %v252, 16
    %v333 = vpop.permute.xlu0 %332
    %v336 = vsel %vm61, %v320, %v331
    %v337 = vsel %vm61, %v325, %v333
    %v338 = vlaneseq
    %v339 = vshrl.u32 %v338, 7
    %v340 = vsub.s32 3, %v339
    %v341 = vrot.slane %v59, %v340
    %vm342 = vcmask 261120
    %v344 = vsel %vm342, %v336, 0
    %v347 = vsel %vm342, %v337, 0
    %349 = vmatprep.subr.mxu0 0.0
    %350 = vmatpush1.msra.mxu0 %v47
    %351 = vmatprep.subr.mxu0 0.0
    %352 = vmatpush1.msra.mxu0 %v48
    %353 = vmatprep.subr.mxu0 0.0
    %354 = vmatpush1.msra.mxu0 %v49
    %355 = vmatprep.subr.mxu0 0.0
    %356 = vmatpush1.msra.mxu0 %v50
    %357 = vmatprep.subr.mxu0 0.0
    %358 = vmatpush1.msra.mxu0 0.0
    %359 = vmatprep.subr.mxu0 0.0
    %360 = vmatpush1.msra.mxu0 0.0
    %361 = vmatprep.subr.mxu0 0.0
    %362 = vmatpush1.msra.mxu0 0.0
    %363 = vmatprep.subr.mxu0 0.0
    %364 = vmatpush1.msra.mxu0 0.0
    %365 = vmatprep.subr.mxu0 0.0
    %366 = vmatpush1.msra.mxu0 0.0
    %367 = vmatprep.subr.mxu0 0.0
    %368 = vmatpush1.msra.mxu0 0.0
    %369 = vmatprep.subr.mxu0 0.0
    %370 = vmatpush1.msra.mxu0 0.0
    %371 = vmatprep.subr.mxu0 0.0
    %372 = vmatpush1.msra.mxu0 0.0
    %373 = vmatprep.subr.mxu0 0.0
    %374 = vmatpush1.msra.mxu0 0.0
    %375 = vmatprep.subr.mxu0 0.0
    %376 = vmatpush1.msra.mxu0 0.0
    %377 = vmatprep.subr.mxu0 0.0
    %378 = vmatpush1.msra.mxu0 0.0
    %379 = vmatprep.subr.mxu0 0.0
    %380 = vmatpush1.msra.mxu0 0.0
    %381 = vmatprep.subr.mxu0 0.0
    %382 = vmatpush1.msra.mxu0 0.0
    %383 = vmatprep.subr.mxu0 0.0
    %384 = vmatpush1.msra.mxu0 0.0
    %385 = vmatprep.subr.mxu0 0.0
    %386 = vmatpush1.msra.mxu0 0.0
    %387 = vmatprep.subr.mxu0 0.0
    %388 = vmatpush1.msra.mxu0 0.0
    %389 = vmatprep.subr.mxu0 0.0
    %390 = vmatpush1.msra.mxu0 0.0
    %391 = vmatprep.subr.mxu0 0.0
    %392 = vmatpush1.msra.mxu0 0.0
    %393 = vmatprep.subr.mxu0 0.0
    %394 = vmatpush1.msra.mxu0 0.0
    %395 = vmatprep.subr.mxu0 0.0
    %396 = vmatpush1.msra.mxu0 0.0
    %397 = vmatprep.subr.mxu0 0.0
    %398 = vmatpush1.msra.mxu0 0.0
    %399 = vmatprep.subr.mxu0 0.0
    %400 = vmatpush1.msra.mxu0 0.0
    %401 = vmatprep.subr.mxu0 0.0
    %402 = vmatpush1.msra.mxu0 0.0
    %403 = vmatprep.subr.mxu0 0.0
    %404 = vmatpush1.msra.mxu0 0.0
    %405 = vmatprep.subr.mxu0 0.0
    %406 = vmatpush1.msra.mxu0 0.0
    %407 = vmatprep.subr.mxu0 0.0
    %408 = vmatpush1.msra.mxu0 0.0
    %409 = vmatprep.subr.mxu0 0.0
    %410 = vmatpush1.msra.mxu0 0.0
    %411 = vmatprep.subr.mxu0 0.0
    %412 = vmatpush1.msra.mxu0 0.0
    %413 = vmatprep.mubr.f32.mxu0 0.0
    %414 = vmatmul.mubr.f32.gmra.mrb[0].mxu0 %v344
    %v415 = vpop.f32.mrb[0].mxu0
    %v416 = vadd.f32 %v341, %v415
    %v417 = vpop.f32.mrb[0].mxu0
    %418 = vmatprep.mubr.f32.mxu0 0.0
    %419 = vmatmul.mubr.f32.gmra.mrb[0].mxu0 %v347
    %v420 = vpop.f32.mrb[0].mxu0
    %v421 = vadd.f32 %v341, %v420
    %v422 = vpop.f32.mrb[0].mxu0
    %423 = vdwg.mxu0
    %v424 = vmax.f32 %v416, 0.0
    %v425 = vmax.f32 %v421, 0.0
    %v426 = vlaneseq
    %v427 = vshrl.u32 %v426, 7
    %v428 = vsub.s32 4, %v427
    %v429 = vrot.slane %v59, %v428
    %v430 = vmul.f32 %v424, %v429
    %v431 = vmul.f32 %v425, %v429
    %v432 = vlaneseq
    %v433 = vshrl.u32 %v432, 7
    %v434 = vsub.s32 5, %v433
    %v435 = vrot.slane %v59, %v434
    %v436 = vadd.f32 %v430, %v435
    %v437 = vadd.f32 %v431, %v435
    %438 = vmatprep.subr.mxu0 0.0
    %439 = vmatpush1.msra.mxu0 %v436
    %440 = vmatprep.subr.mxu0 0.0
    %441 = vmatpush1.msra.mxu0 %v437
    %442 = vmatprep.subr.mxu0 0.0
    %443 = vmatpush1.msra.mxu0 0.0
    %444 = vmatprep.subr.mxu0 0.0
    %445 = vmatpush1.msra.mxu0 0.0
    %446 = vmatprep.subr.mxu0 0.0
    %447 = vmatpush1.msra.mxu0 0.0
    %448 = vmatprep.subr.mxu0 0.0
    %449 = vmatpush1.msra.mxu0 0.0
    %450 = vmatprep.subr.mxu0 0.0
    %451 = vmatpush1.msra.mxu0 0.0
    %452 = vmatprep.subr.mxu0 0.0
    %453 = vmatpush1.msra.mxu0 0.0
    %454 = vmatprep.subr.mxu0 0.0
    %455 = vmatpush1.msra.mxu0 0.0
    %456 = vmatprep.subr.mxu0 0.0
    %457 = vmatpush1.msra.mxu0 0.0
    %458 = vmatprep.subr.mxu0 0.0
    %459 = vmatpush1.msra.mxu0 0.0
    %460 = vmatprep.subr.mxu0 0.0
    %461 = vmatpush1.msra.mxu0 0.0
    %462 = vmatprep.subr.mxu0 0.0
    %463 = vmatpush1.msra.mxu0 0.0
    %464 = vmatprep.subr.mxu0 0.0
    %465 = vmatpush1.msra.mxu0 0.0
    %466 = vmatprep.subr.mxu0 0.0
    %467 = vmatpush1.msra.mxu0 0.0
    %468 = vmatprep.subr.mxu0 0.0
    %469 = vmatpush1.msra.mxu0 0.0
    %470 = vmatprep.subr.mxu0 0.0
    %471 = vmatpush1.msra.mxu0 0.0
    %472 = vmatprep.subr.mxu0 0.0
    %473 = vmatpush1.msra.mxu0 0.0
    %474 = vmatprep.subr.mxu0 0.0
    %475 = vmatpush1.msra.mxu0 0.0
    %476 = vmatprep.subr.mxu0 0.0
    %477 = vmatpush1.msra.mxu0 0.0
    %478 = vmatprep.subr.mxu0 0.0
    %479 = vmatpush1.msra.mxu0 0.0
    %480 = vmatprep.subr.mxu0 0.0
    %481 = vmatpush1.msra.mxu0 0.0
    %482 = vmatprep.subr.mxu0 0.0
    %483 = vmatpush1.msra.mxu0 0.0
    %484 = vmatprep.subr.mxu0 0.0
    %485 = vmatpush1.msra.mxu0 0.0
    %486 = vmatprep.subr.mxu0 0.0
    %487 = vmatpush1.msra.mxu0 0.0
    %488 = vmatprep.subr.mxu0 0.0
    %489 = vmatpush1.msra.mxu0 0.0
    %490 = vmatprep.subr.mxu0 0.0
    %491 = vmatpush1.msra.mxu0 0.0
    %492 = vmatprep.subr.mxu0 0.0
    %493 = vmatpush1.msra.mxu0 0.0
    %494 = vmatprep.subr.mxu0 0.0
    %495 = vmatpush1.msra.mxu0 0.0
    %496 = vmatprep.subr.mxu0 0.0
    %497 = vmatpush1.msra.mxu0 0.0
    %498 = vmatprep.subr.mxu0 0.0
    %499 = vmatpush1.msra.mxu0 0.0
    %500 = vmatprep.subr.mxu0 0.0
    %501 = vmatpush1.msra.mxu0 0.0
    %502 = vmatprep.mubr.f32.mxu0 0.0
    %503 = vmatmul.mubr.f32.gmra.mrb[0].mxu0 %v63
    %v504 = vpop.f32.mrb[0].mxu0
    %v505 = vadd.f32 0.0, %v504
    %v506 = vpop.f32.mrb[0].mxu0
    %507 = vmatprep.mubr.f32.mxu0 0.0
    %508 = vmatmul.mubr.f32.gmra.mrb[0].mxu0 %v66
    %v509 = vpop.f32.mrb[0].mxu0
    %v510 = vadd.f32 0.0, %v509
    %v511 = vpop.f32.mrb[0].mxu0
    %512 = vdwg.mxu0
    %515 = vrot.lane.b32.xlu0 %v436, 16
    %v516 = vpop.permute.xlu0 %515
    %517 = vrot.lane.b32.xlu0 %v437, 16
    %v518 = vpop.permute.xlu0 %517
    %v521 = vsel %vm61, %v505, %v516
    %v522 = vsel %vm61, %v510, %v518
    %v523 = vlaneseq
    %v524 = vshrl.u32 %v523, 7
    %v525 = vsub.s32 6, %v524
    %v526 = vrot.slane %v59, %v525
    %v528 = vsel %vm342, %v521, 0
    %v531 = vsel %vm342, %v522, 0
    %533 = vmatprep.subr.mxu0 0.0
    %534 = vmatpush1.msra.mxu0 %v51
    %535 = vmatprep.subr.mxu0 0.0
    %536 = vmatpush1.msra.mxu0 %v52
    %537 = vmatprep.subr.mxu0 0.0
    %538 = vmatpush1.msra.mxu0 %v53
    %539 = vmatprep.subr.mxu0 0.0
    %540 = vmatpush1.msra.mxu0 %v54
    %541 = vmatprep.subr.mxu0 0.0
    %542 = vmatpush1.msra.mxu0 0.0
    %543 = vmatprep.subr.mxu0 0.0
    %544 = vmatpush1.msra.mxu0 0.0
    %545 = vmatprep.subr.mxu0 0.0
    %546 = vmatpush1.msra.mxu0 0.0
    %547 = vmatprep.subr.mxu0 0.0
    %548 = vmatpush1.msra.mxu0 0.0
    %549 = vmatprep.subr.mxu0 0.0
    %550 = vmatpush1.msra.mxu0 0.0
    %551 = vmatprep.subr.mxu0 0.0
    %552 = vmatpush1.msra.mxu0 0.0
    %553 = vmatprep.subr.mxu0 0.0
    %554 = vmatpush1.msra.mxu0 0.0
    %555 = vmatprep.subr.mxu0 0.0
    %556 = vmatpush1.msra.mxu0 0.0
    %557 = vmatprep.subr.mxu0 0.0
    %558 = vmatpush1.msra.mxu0 0.0
    %559 = vmatprep.subr.mxu0 0.0
    %560 = vmatpush1.msra.mxu0 0.0
    %561 = vmatprep.subr.mxu0 0.0
    %562 = vmatpush1.msra.mxu0 0.0
    %563 = vmatprep.subr.mxu0 0.0
    %564 = vmatpush1.msra.mxu0 0.0
    %565 = vmatprep.subr.mxu0 0.0
    %566 = vmatpush1.msra.mxu0 0.0
    %567 = vmatprep.subr.mxu0 0.0
    %568 = vmatpush1.msra.mxu0 0.0
    %569 = vmatprep.subr.mxu0 0.0
    %570 = vmatpush1.msra.mxu0 0.0
    %571 = vmatprep.subr.mxu0 0.0
    %572 = vmatpush1.msra.mxu0 0.0
    %573 = vmatprep.subr.mxu0 0.0
    %574 = vmatpush1.msra.mxu0 0.0
    %575 = vmatprep.subr.mxu0 0.0
    %576 = vmatpush1.msra.mxu0 0.0
    %577 = vmatprep.subr.mxu0 0.0
    %578 = vmatpush1.msra.mxu0 0.0
    %579 = vmatprep.subr.mxu0 0.0
    %580 = vmatpush1.msra.mxu0 0.0
    %581 = vmatprep.subr.mxu0 0.0
    %582 = vmatpush1.msra.mxu0 0.0
    %583 = vmatprep.subr.mxu0 0.0
    %584 = vmatpush1.msra.mxu0 0.0
    %585 = vmatprep.subr.mxu0 0.0
    %586 = vmatpush1.msra.mxu0 0.0
    %587 = vmatprep.subr.mxu0 0.0
    %588 = vmatpush1.msra.mxu0 0.0
    %589 = vmatprep.subr.mxu0 0.0
    %590 = vmatpush1.msra.mxu0 0.0
    %591 = vmatprep.subr.mxu0 0.0
    %592 = vmatpush1.msra.mxu0 0.0
    %593 = vmatprep.subr.mxu0 0.0
    %594 = vmatpush1.msra.mxu0 0.0
    %595 = vmatprep.subr.mxu0 0.0
    %596 = vmatpush1.msra.mxu0 0.0
    %597 = vmatprep.mubr.f32.mxu0 0.0
    %598 = vmatmul.mubr.f32.gmra.mrb[0].mxu0 %v528
    %v599 = vpop.f32.mrb[0].mxu0
    %v600 = vadd.f32 %v526, %v599
    %v601 = vpop.f32.mrb[0].mxu0
    %602 = vmatprep.mubr.f32.mxu0 0.0
    %603 = vmatmul.mubr.f32.gmra.mrb[0].mxu0 %v531
    %v604 = vpop.f32.mrb[0].mxu0
    %v605 = vadd.f32 %v526, %v604
    %v606 = vpop.f32.mrb[0].mxu0
    %607 = vdwg.mxu0
    %v608 = vmax.f32 %v600, 0.0
    %v609 = vmax.f32 %v605, 0.0
    %v611 = vsel %vm61, %v44, 0
    %613 = vmatprep.subr.mxu0 0.0
    %614 = vmatpush1.msra.mxu0 %v608
    %615 = vmatprep.subr.mxu0 0.0
    %616 = vmatpush1.msra.mxu0 %v609
    %617 = vmatprep.subr.mxu0 0.0
    %618 = vmatpush1.msra.mxu0 0.0
    %619 = vmatprep.subr.mxu0 0.0
    %620 = vmatpush1.msra.mxu0 0.0
    %621 = vmatprep.subr.mxu0 0.0
    %622 = vmatpush1.msra.mxu0 0.0
    %623 = vmatprep.subr.mxu0 0.0
    %624 = vmatpush1.msra.mxu0 0.0
    %625 = vmatprep.subr.mxu0 0.0
    %626 = vmatpush1.msra.mxu0 0.0
    %627 = vmatprep.subr.mxu0 0.0
    %628 = vmatpush1.msra.mxu0 0.0
    %629 = vmatprep.subr.mxu0 0.0
    %630 = vmatpush1.msra.mxu0 0.0
    %631 = vmatprep.subr.mxu0 0.0
    %632 = vmatpush1.msra.mxu0 0.0
    %633 = vmatprep.subr.mxu0 0.0
    %634 = vmatpush1.msra.mxu0 0.0
    %635 = vmatprep.subr.mxu0 0.0
    %636 = vmatpush1.msra.mxu0 0.0
    %637 = vmatprep.subr.mxu0 0.0
    %638 = vmatpush1.msra.mxu0 0.0
    %639 = vmatprep.subr.mxu0 0.0
    %640 = vmatpush1.msra.mxu0 0.0
    %641 = vmatprep.subr.mxu0 0.0
    %642 = vmatpush1.msra.mxu0 0.0
    %643 = vmatprep.subr.mxu0 0.0
    %644 = vmatpush1.msra.mxu0 0.0
    %645 = vmatprep.subr.mxu0 0.0
    %646 = vmatpush1.msra.mxu0 0.0
    %647 = vmatprep.subr.mxu0 0.0
    %648 = vmatpush1.msra.mxu0 0.0
    %649 = vmatprep.subr.mxu0 0.0
    %650 = vmatpush1.msra.mxu0 0.0
    %651 = vmatprep.subr.mxu0 0.0
    %652 = vmatpush1.msra.mxu0 0.0
    %653 = vmatprep.subr.mxu0 0.0
    %654 = vmatpush1.msra.mxu0 0.0
    %655 = vmatprep.subr.mxu0 0.0
    %656 = vmatpush1.msra.mxu0 0.0
    %657 = vmatprep.subr.mxu0 0.0
    %658 = vmatpush1.msra.mxu0 0.0
    %659 = vmatprep.subr.mxu0 0.0
    %660 = vmatpush1.msra.mxu0 0.0
    %661 = vmatprep.subr.mxu0 0.0
    %662 = vmatpush1.msra.mxu0 0.0
    %663 = vmatprep.subr.mxu0 0.0
    %664 = vmatpush1.msra.mxu0 0.0
    %665 = vmatprep.subr.mxu0 0.0
    %666 = vmatpush1.msra.mxu0 0.0
    %667 = vmatprep.subr.mxu0 0.0
    %668 = vmatpush1.msra.mxu0 0.0
    %669 = vmatprep.subr.mxu0 0.0
    %670 = vmatpush1.msra.mxu0 0.0
    %671 = vmatprep.subr.mxu0 0.0
    %672 = vmatpush1.msra.mxu0 0.0
    %673 = vmatprep.subr.mxu0 0.0
    %674 = vmatpush1.msra.mxu0 0.0
    %675 = vmatprep.subr.mxu0 0.0
    %676 = vmatpush1.msra.mxu0 0.0
    %677 = vmatprep.mubr.f32.mxu0 0.0
    %678 = vmatmul.mubr.f32.gmra.mrb[0].mxu0 %v611
    %v679 = vpop.f32.mrb[0].mxu0
    %v680 = vadd.f32 0.0, %v679
    %v681 = vpop.f32.mrb[0].mxu0
    %682 = vdwg.mxu0
    %v683 = vlaneseq
    %v684 = vshrl.u32 %v683, 7
    %v685 = vsub.s32 7, %v684
    %v686 = vrot.slane %v59, %v685
    %v688 = vsel %vm61, %v680, 0
    %690 = vmatprep.subr.mxu0 0.0
    %691 = vmatpush1.msra.mxu0 %v55
    %692 = vmatprep.subr.mxu0 0.0
    %693 = vmatpush1.msra.mxu0 %v56
    %694 = vmatprep.subr.mxu0 0.0
    %695 = vmatpush1.msra.mxu0 0.0
    %696 = vmatprep.subr.mxu0 0.0
    %697 = vmatpush1.msra.mxu0 0.0
    %698 = vmatprep.subr.mxu0 0.0
    %699 = vmatpush1.msra.mxu0 0.0
    %700 = vmatprep.subr.mxu0 0.0
    %701 = vmatpush1.msra.mxu0 0.0
    %702 = vmatprep.subr.mxu0 0.0
    %703 = vmatpush1.msra.mxu0 0.0
    %704 = vmatprep.subr.mxu0 0.0
    %705 = vmatpush1.msra.mxu0 0.0
    %706 = vmatprep.subr.mxu0 0.0
    %707 = vmatpush1.msra.mxu0 0.0
    %708 = vmatprep.subr.mxu0 0.0
    %709 = vmatpush1.msra.mxu0 0.0
    %710 = vmatprep.subr.mxu0 0.0
    %711 = vmatpush1.msra.mxu0 0.0
    %712 = vmatprep.subr.mxu0 0.0
    %713 = vmatpush1.msra.mxu0 0.0
    %714 = vmatprep.subr.mxu0 0.0
    %715 = vmatpush1.msra.mxu0 0.0
    %716 = vmatprep.subr.mxu0 0.0
    %717 = vmatpush1.msra.mxu0 0.0
    %718 = vmatprep.subr.mxu0 0.0
    %719 = vmatpush1.msra.mxu0 0.0
    %720 = vmatprep.subr.mxu0 0.0
    %721 = vmatpush1.msra.mxu0 0.0
    %722 = vmatprep.subr.mxu0 0.0
    %723 = vmatpush1.msra.mxu0 0.0
    %724 = vmatprep.subr.mxu0 0.0
    %725 = vmatpush1.msra.mxu0 0.0
    %726 = vmatprep.subr.mxu0 0.0
    %727 = vmatpush1.msra.mxu0 0.0
    %728 = vmatprep.subr.mxu0 0.0
    %729 = vmatpush1.msra.mxu0 0.0
    %730 = vmatprep.subr.mxu0 0.0
    %731 = vmatpush1.msra.mxu0 0.0
    %732 = vmatprep.subr.mxu0 0.0
    %733 = vmatpush1.msra.mxu0 0.0
    %734 = vmatprep.subr.mxu0 0.0
    %735 = vmatpush1.msra.mxu0 0.0
    %736 = vmatprep.subr.mxu0 0.0
    %737 = vmatpush1.msra.mxu0 0.0
    %738 = vmatprep.subr.mxu0 0.0
    %739 = vmatpush1.msra.mxu0 0.0
    %740 = vmatprep.subr.mxu0 0.0
    %741 = vmatpush1.msra.mxu0 0.0
    %742 = vmatprep.subr.mxu0 0.0
    %743 = vmatpush1.msra.mxu0 0.0
    %744 = vmatprep.subr.mxu0 0.0
    %745 = vmatpush1.msra.mxu0 0.0
    %746 = vmatprep.subr.mxu0 0.0
    %747 = vmatpush1.msra.mxu0 0.0
    %748 = vmatprep.subr.mxu0 0.0
    %749 = vmatpush1.msra.mxu0 0.0
    %750 = vmatprep.subr.mxu0 0.0
    %751 = vmatpush1.msra.mxu0 0.0
    %752 = vmatprep.subr.mxu0 0.0
    %753 = vmatpush1.msra.mxu0 0.0
    %754 = vmatprep.mubr.f32.mxu0 0.0
    %755 = vmatmul.mubr.f32.gmra.mrb[0].mxu0 %v688
    %v756 = vpop.f32.mrb[0].mxu0
    %v757 = vadd.f32 %v686, %v756
    %v758 = vpop.f32.mrb[0].mxu0
    %759 = vdwg.mxu0
    %v760 = vmax.f32 %v757, 0.0
    %v761 = vlaneseq
    %v762 = vshrl.u32 %v761, 7
    %v763 = vsub.s32 0, %v762
    %v764 = vrot.slane %v60, %v763
    %v766 = vsel %vm61, %v760, 0
    %768 = vmatprep.subr.mxu0 0.0
    %769 = vmatpush1.msra.mxu0 %v57
    %770 = vmatprep.subr.mxu0 0.0
    %771 = vmatpush1.msra.mxu0 %v58
    %772 = vmatprep.subr.mxu0 0.0
    %773 = vmatpush1.msra.mxu0 0.0
    %774 = vmatprep.subr.mxu0 0.0
    %775 = vmatpush1.msra.mxu0 0.0
    %776 = vmatprep.subr.mxu0 0.0
    %777 = vmatpush1.msra.mxu0 0.0
    %778 = vmatprep.subr.mxu0 0.0
    %779 = vmatpush1.msra.mxu0 0.0
    %780 = vmatprep.subr.mxu0 0.0
    %781 = vmatpush1.msra.mxu0 0.0
    %782 = vmatprep.subr.mxu0 0.0
    %783 = vmatpush1.msra.mxu0 0.0
    %784 = vmatprep.subr.mxu0 0.0
    %785 = vmatpush1.msra.mxu0 0.0
    %786 = vmatprep.subr.mxu0 0.0
    %787 = vmatpush1.msra.mxu0 0.0
    %788 = vmatprep.subr.mxu0 0.0
    %789 = vmatpush1.msra.mxu0 0.0
    %790 = vmatprep.subr.mxu0 0.0
    %791 = vmatpush1.msra.mxu0 0.0
    %792 = vmatprep.subr.mxu0 0.0
    %793 = vmatpush1.msra.mxu0 0.0
    %794 = vmatprep.subr.mxu0 0.0
    %795 = vmatpush1.msra.mxu0 0.0
    %796 = vmatprep.subr.mxu0 0.0
    %797 = vmatpush1.msra.mxu0 0.0
    %798 = vmatprep.subr.mxu0 0.0
    %799 = vmatpush1.msra.mxu0 0.0
    %800 = vmatprep.subr.mxu0 0.0
    %801 = vmatpush1.msra.mxu0 0.0
    %802 = vmatprep.subr.mxu0 0.0
    %803 = vmatpush1.msra.mxu0 0.0
    %804 = vmatprep.subr.mxu0 0.0
    %805 = vmatpush1.msra.mxu0 0.0
    %806 = vmatprep.subr.mxu0 0.0
    %807 = vmatpush1.msra.mxu0 0.0
    %808 = vmatprep.subr.mxu0 0.0
    %809 = vmatpush1.msra.mxu0 0.0
    %810 = vmatprep.subr.mxu0 0.0
    %811 = vmatpush1.msra.mxu0 0.0
    %812 = vmatprep.subr.mxu0 0.0
    %813 = vmatpush1.msra.mxu0 0.0
    %814 = vmatprep.subr.mxu0 0.0
    %815 = vmatpush1.msra.mxu0 0.0
    %816 = vmatprep.subr.mxu0 0.0
    %817 = vmatpush1.msra.mxu0 0.0
    %818 = vmatprep.subr.mxu0 0.0
    %819 = vmatpush1.msra.mxu0 0.0
    %820 = vmatprep.subr.mxu0 0.0
    %821 = vmatpush1.msra.mxu0 0.0
    %822 = vmatprep.subr.mxu0 0.0
    %823 = vmatpush1.msra.mxu0 0.0
    %824 = vmatprep.subr.mxu0 0.0
    %825 = vmatpush1.msra.mxu0 0.0
    %826 = vmatprep.subr.mxu0 0.0
    %827 = vmatpush1.msra.mxu0 0.0
    %828 = vmatprep.subr.mxu0 0.0
    %829 = vmatpush1.msra.mxu0 0.0
    %830 = vmatprep.subr.mxu0 0.0
    %831 = vmatpush1.msra.mxu0 0.0
    %832 = vmatprep.mubr.f32.mxu0 0.0
    %833 = vmatmul.mubr.f32.gmra.mrb[0].mxu0 %v766
    %v834 = vpop.f32.mrb[0].mxu0
    %v835 = vadd.f32 %v764, %v834
    %v836 = vpop.f32.mrb[0].mxu0
    %837 = vdwg.mxu0
    %838 = vst [vmem:[#allocation7] sm:$0xff] %v835
    // Predicated region
    $region18: #{tpu_custom_call.1} parent=1 // pred_check
      _
    $region19: #{tpu_custom_call.1} parent=1 // pred_check_branch
      %840 = sbr.rel (0) target = $region21
    $region20: #{tpu_custom_call.1} parent=1 // pred_region
      %s842 = ssub.s32 128, 128
      %843 = vsyncadd [#allocation4], %s842
      %s845 = sshll.u32 [#allocation7], 4
      %s846 = int_to_ptr.vmem [resolvable:$true] %s845
      %848 = dma.vmem_to_hbm [thread:$0]  %s846, 128, %s2, [#allocation4]
    $region21: #{tpu_custom_call.1} parent=1 // pred_fallthru
      _
    // Predicated region
    $region22: #{tpu_custom_call.1} parent=1 // pred_check
      _
    $region23: #{tpu_custom_call.1} parent=1 // pred_check_branch
      %850 = sbr.rel (0) target = $region25
    $region24: #{tpu_custom_call.1} parent=1 // pred_region
      %851 = dma.done [#allocation4], 128
    $region25: #{tpu_custom_call.1} parent=1 // pred_fallthru
      _
    %852 = vsyncpa [#allocation3], 1
    %853 = vsyncpa [#allocation6], 1
    %854 = vsyncpa [#allocation4], 1

</llo_original>
